<compile_context>
chip_gen: v5e
topology: v5e:2x2
jax: 0.10.0
libtpu: 0.0.40
codegen_flags: <defaults>
</compile_context>

<pallas_src>
import jax
import jax.numpy as jnp
from jax.experimental import pallas as pl
from jax.experimental.pallas import tpu as pltpu


def _round_up(n, m):
    return ((n + m - 1) // m) * m


def dqn_kernel(x_ref, w1_ref, b1_ref, w2_ref, b2_ref,
               w3_ref, b3_ref, w4_ref, b4_ref, out_ref):
    # x arrives bf16; MXU matmuls take bf16 inputs, accumulate in f32.
    x = x_ref[...]

    h = jnp.dot(x, w1_ref[...], preferred_element_type=jnp.float32) + b1_ref[...]
    h = jnp.maximum(h, 0.0)

    h = jnp.dot(h.astype(jnp.bfloat16), w2_ref[...],
                preferred_element_type=jnp.float32) + b2_ref[...]
    h = jnp.maximum(h, 0.0)

    h = jnp.dot(h.astype(jnp.bfloat16), w3_ref[...],
                preferred_element_type=jnp.float32) + b3_ref[...]
    h = jnp.maximum(h, 0.0)

    logits = jnp.dot(h.astype(jnp.bfloat16), w4_ref[...],
                     preferred_element_type=jnp.float32) + b4_ref[...]

    # Numerically stable log_softmax along dim=1 (block holds full out_dim,
    # so no padding enters the reductions).
    m = jnp.max(logits, axis=1, keepdims=True)
    z = logits - m
    lse = jnp.log(jnp.sum(jnp.exp(z), axis=1, keepdims=True))
    out_ref[...] = z - lse


def _pick_batch_tile(B, batch_tile):
    """Batch tile: multiple of 8 sublanes, <= batch_tile, and at least 2 grid
    blocks when the batch is large enough (so both TCs on v7x get work)."""
    b8 = _round_up(B, 8)
    tb = min(batch_tile, b8)
    if b8 >= 512:
        tb = min(tb, _round_up((b8 + 1) // 2, 8))
    return max(tb, 8)


def dqn_forward(x, params, *, batch_tile=1024):
    """Fused DQN forward.  x: [B, F] (any float dtype).  Returns [B, out] f32."""
    (w1, b1), (w2, b2), (w3, b3), (w4, b4) = params
    B, F = x.shape
    H_pad = w1.shape[1]
    out_dim = w4.shape[1]

    # Stream x in bf16: the kernel feeds the MXU in bf16 anyway, so this only
    # halves the per-step DMA bytes.  (Mirrors x.float() -> bf16 truncation.)
    x = x.astype(jnp.bfloat16)

    TB = _pick_batch_tile(B, batch_tile)
    B_pad = _round_up(B, TB)
    if B_pad != B:
        x = jnp.pad(x, ((0, B_pad - B), (0, 0)))
    n_blocks = B_pad // TB

    # --- scheduler hint + VMEM sizing -------------------------------------
    weight_bytes = sum(int(w.size) * w.dtype.itemsize +
                       int(b.size) * b.dtype.itemsize for (w, b) in params)
    flops = 2 * B_pad * (F * H_pad + 2 * H_pad * H_pad + H_pad * out_dim)
    transcendentals = B_pad * out_dim  # exp in log_softmax
    bytes_accessed = B_pad * F * 2 + B_pad * out_dim * 4 + weight_bytes
    cost = pl.CostEstimate(flops=flops, transcendentals=transcendentals,
                           bytes_accessed=bytes_accessed)

    # Rough per-step VMEM footprint: resident weights (x2 headroom) +
    # double-buffered x/out tiles + f32 hidden intermediates.  Only raise the
    # scoped-VMEM limit when it would exceed v5e's 16 MiB default.
    vmem_est = (2 * weight_bytes
                + 2 * TB * F * 2
                + 2 * TB * out_dim * 4
                + 3 * TB * H_pad * 4)
    vmem_limit = int(vmem_est * 1.5) if vmem_est > 12 * 1024 * 1024 else None

    compiler_params = pltpu.CompilerParams(
        dimension_semantics=("parallel",),
        vmem_limit_bytes=vmem_limit)

    const2 = lambda i: (0, 0)

    def _build(single_buffer_weights):
        wkw = {}
        if single_buffer_weights and hasattr(pl, "Buffered"):
            # Constant-index blocks don't need double buffering.
            wkw = {"pipeline_mode": pl.Buffered(1)}
        in_specs = [
            pl.BlockSpec((TB, F), lambda i: (i, 0)),        # x tile (streamed)
            pl.BlockSpec((F, H_pad), const2, **wkw),        # w1 (resident)
            pl.BlockSpec((1, H_pad), const2, **wkw),        # b1
            pl.BlockSpec((H_pad, H_pad), const2, **wkw),    # w2
            pl.BlockSpec((1, H_pad), const2, **wkw),        # b2
            pl.BlockSpec((H_pad, H_pad), const2, **wkw),    # w3
            pl.BlockSpec((1, H_pad), const2, **wkw),        # b3
            pl.BlockSpec((H_pad, out_dim), const2, **wkw),  # w4
            pl.BlockSpec((1, out_dim), const2, **wkw),      # b4
        ]
        return pl.pallas_call(
            dqn_kernel,
            out_shape=jax.ShapeDtypeStruct((B_pad, out_dim), jnp.float32),
            grid=(n_blocks,),
            in_specs=in_specs,
            out_specs=pl.BlockSpec((TB, out_dim), lambda i: (i, 0)),
            compiler_params=compiler_params,
            cost_estimate=cost,
        )

    args = (x, w1, b1, w2, b2, w3, b3, w4, b4)
    try:
        out = _build(True)(*args)
    except Exception:
        # Fallback: default (double-buffered) specs if this JAX build rejects
        # single-buffered constant blocks.
        out = _build(False)(*args)

    return out[:B]


def init_dqn_params(key, inputs, outputs, hidden_size=None, lane=128):
    """Matches the PyTorch module's init (kaiming_normal_ weights, default
    uniform biases) computed at the TRUE fan-in, then zero-padded so the
    hidden dim is a multiple of 128 lanes.  Weights stored bf16, biases f32."""
    if hidden_size is None:
        hidden_size = max(64, int((inputs + outputs) / 2))
    h_pad = _round_up(hidden_size, lane)

    # (true_in, true_out, padded_in, padded_out)
    dims = [(inputs,      hidden_size, inputs, h_pad),
            (hidden_size, hidden_size, h_pad,  h_pad),
            (hidden_size, hidden_size, h_pad,  h_pad),
            (hidden_size, outputs,     h_pad,  outputs)]

    params = []
    for (fan_in, fan_out, pad_in, pad_out) in dims:
        key, kw, kb = jax.random.split(key, 3)
        std = (2.0 / fan_in) ** 0.5          # kaiming_normal_, fan_in mode
        w = std * jax.random.normal(kw, (fan_in, fan_out), dtype=jnp.float32)
        bound = 1.0 / (fan_in ** 0.5)        # PyTorch default bias init
        b = jax.random.uniform(kb, (1, fan_out), dtype=jnp.float32,
                               minval=-bound, maxval=bound)
        # Zero-pad to lane-friendly shapes; pad entries are exactly 0 so the
        # forward pass is unchanged.
        w_pad = jnp.zeros((pad_in, pad_out), jnp.bfloat16)
        w_pad = w_pad.at[:fan_in, :fan_out].set(w.astype(jnp.bfloat16))
        b_pad = jnp.zeros((1, pad_out), jnp.float32)
        b_pad = b_pad.at[:, :fan_out].set(b)
        params.append((w_pad, b_pad))
    return params


def _ref_forward(x, params):
    """Plain-JAX reference using the same bf16-weight / f32-accum recipe."""
    def lin(h, w, b):
        return jnp.dot(h.astype(jnp.bfloat16), w,
                       preferred_element_type=jnp.float32) + b
    (w1, b1), (w2, b2), (w3, b3), (w4, b4) = params
    h = x.astype(jnp.float32)
    h = jnp.maximum(lin(h, w1, b1), 0.0)
    h = jnp.maximum(lin(h, w2, b2), 0.0)
    h = jnp.maximum(lin(h, w3, b3), 0.0)
    logits = lin(h, w4, b4)
    return jax.nn.log_softmax(logits, axis=1)


if __name__ == "__main__":
    batch = 2
    inputs = 16
    outputs = 4          # hidden_size -> max(64, 10) = 64, padded to 128

    key = jax.random.PRNGKey(0)
    key, kx = jax.random.split(key)
    x = jax.random.normal(kx, (batch, inputs), dtype=jnp.float32)

    params = init_dqn_params(key, inputs, outputs)

    out = dqn_forward(x, params)
    out = jax.block_until_ready(out)

    assert out.shape == (batch, outputs)
    # log_softmax rows should exp-sum to ~1
    row_sums = jnp.sum(jnp.exp(out), axis=1)
    assert bool(jnp.all(jnp.abs(row_sums - 1.0) < 1e-2))
    # value check against a plain-JAX reference with the same precision recipe
    ref = _ref_forward(x, params)
    assert bool(jnp.allclose(out, ref, atol=2e-2, rtol=2e-2))

    print("KERNEL_OK")
</pallas_src>

<mosaic_0001>
module attributes {stable_mosaic.version = 11 : i64} {
  func.func @dqn_kernel(%arg0: i32, %arg1: memref<8x16xbf16, #tpu.memory_space<vmem>>, %arg2: memref<16x128xbf16, #tpu.memory_space<vmem>>, %arg3: memref<1x128xf32, #tpu.memory_space<vmem>>, %arg4: memref<128x128xbf16, #tpu.memory_space<vmem>>, %arg5: memref<1x128xf32, #tpu.memory_space<vmem>>, %arg6: memref<128x128xbf16, #tpu.memory_space<vmem>>, %arg7: memref<1x128xf32, #tpu.memory_space<vmem>>, %arg8: memref<128x4xbf16, #tpu.memory_space<vmem>>, %arg9: memref<1x4xf32, #tpu.memory_space<vmem>>, %arg10: memref<8x4xf32, #tpu.memory_space<vmem>>) attributes {dimension_semantics = [#tpu.dimension_semantics<parallel>], iteration_bounds = array<i64: 1>, scalar_prefetch = 0 : i64, scratch_operands = 0 : i64, tpu.core_type = #tpu.core_type<tc>, window_params = [{transform_indices = @transform_0, window_bounds = array<i64: 8, 16>}, {pipeline_mode = #tpu.pipeline_mode<synchronous>, transform_indices = @transform_1, window_bounds = array<i64: 16, 128>}, {pipeline_mode = #tpu.pipeline_mode<synchronous>, transform_indices = @transform_2, window_bounds = array<i64: 1, 128>}, {pipeline_mode = #tpu.pipeline_mode<synchronous>, transform_indices = @transform_3, window_bounds = array<i64: 128, 128>}, {pipeline_mode = #tpu.pipeline_mode<synchronous>, transform_indices = @transform_4, window_bounds = array<i64: 1, 128>}, {pipeline_mode = #tpu.pipeline_mode<synchronous>, transform_indices = @transform_5, window_bounds = array<i64: 128, 128>}, {pipeline_mode = #tpu.pipeline_mode<synchronous>, transform_indices = @transform_6, window_bounds = array<i64: 1, 128>}, {pipeline_mode = #tpu.pipeline_mode<synchronous>, transform_indices = @transform_7, window_bounds = array<i64: 128, 4>}, {pipeline_mode = #tpu.pipeline_mode<synchronous>, transform_indices = @transform_8, window_bounds = array<i64: 1, 4>}, {transform_indices = @transform_9, window_bounds = array<i64: 8, 4>}]} {
    %c0 = arith.constant 0 : index
    %c0_0 = arith.constant 0 : index
    %0 = vector.load %arg1[%c0, %c0_0] : memref<8x16xbf16, #tpu.memory_space<vmem>>, vector<8x16xbf16>
    %c0_1 = arith.constant 0 : index
    %c0_2 = arith.constant 0 : index
    %1 = vector.load %arg2[%c0_1, %c0_2] : memref<16x128xbf16, #tpu.memory_space<vmem>>, vector<16x128xbf16>
    %cst = arith.constant dense<0.000000e+00> : vector<8x128xf32>
    %2 = tpu.matmul %0, %1, %cst {dimension_numbers = #tpu.dot_dimension_numbers<[1], [0], [0], [1], [0, 0, 1, 1], [], []>} : vector<8x16xbf16>, vector<16x128xbf16>, vector<8x128xf32> -> vector<8x128xf32>
    %c0_3 = arith.constant 0 : index
    %c0_4 = arith.constant 0 : index
    %3 = vector.load %arg3[%c0_3, %c0_4] : memref<1x128xf32, #tpu.memory_space<vmem>>, vector<1x128xf32>
    %4 = vector.broadcast %3 : vector<1x128xf32> to vector<8x128xf32>
    %5 = arith.addf %2, %4 : vector<8x128xf32>
    %cst_5 = arith.constant 0.000000e+00 : f32
    %6 = vector.broadcast %cst_5 : f32 to vector<8x128xf32>
    %7 = arith.maximumf %5, %6 : vector<8x128xf32>
    %8 = arith.truncf %7 : vector<8x128xf32> to vector<8x128xbf16>
    %c0_6 = arith.constant 0 : index
    %c0_7 = arith.constant 0 : index
    %9 = vector.load %arg4[%c0_6, %c0_7] : memref<128x128xbf16, #tpu.memory_space<vmem>>, vector<128x128xbf16>
    %cst_8 = arith.constant dense<0.000000e+00> : vector<8x128xf32>
    %10 = tpu.matmul %8, %9, %cst_8 {dimension_numbers = #tpu.dot_dimension_numbers<[1], [0], [0], [1], [0, 0, 1, 1], [], []>} : vector<8x128xbf16>, vector<128x128xbf16>, vector<8x128xf32> -> vector<8x128xf32>
    %c0_9 = arith.constant 0 : index
    %c0_10 = arith.constant 0 : index
    %11 = vector.load %arg5[%c0_9, %c0_10] : memref<1x128xf32, #tpu.memory_space<vmem>>, vector<1x128xf32>
    %12 = vector.broadcast %11 : vector<1x128xf32> to vector<8x128xf32>
    %13 = arith.addf %10, %12 : vector<8x128xf32>
    %cst_11 = arith.constant 0.000000e+00 : f32
    %14 = vector.broadcast %cst_11 : f32 to vector<8x128xf32>
    %15 = arith.maximumf %13, %14 : vector<8x128xf32>
    %16 = arith.truncf %15 : vector<8x128xf32> to vector<8x128xbf16>
    %c0_12 = arith.constant 0 : index
    %c0_13 = arith.constant 0 : index
    %17 = vector.load %arg6[%c0_12, %c0_13] : memref<128x128xbf16, #tpu.memory_space<vmem>>, vector<128x128xbf16>
    %cst_14 = arith.constant dense<0.000000e+00> : vector<8x128xf32>
    %18 = tpu.matmul %16, %17, %cst_14 {dimension_numbers = #tpu.dot_dimension_numbers<[1], [0], [0], [1], [0, 0, 1, 1], [], []>} : vector<8x128xbf16>, vector<128x128xbf16>, vector<8x128xf32> -> vector<8x128xf32>
    %c0_15 = arith.constant 0 : index
    %c0_16 = arith.constant 0 : index
    %19 = vector.load %arg7[%c0_15, %c0_16] : memref<1x128xf32, #tpu.memory_space<vmem>>, vector<1x128xf32>
    %20 = vector.broadcast %19 : vector<1x128xf32> to vector<8x128xf32>
    %21 = arith.addf %18, %20 : vector<8x128xf32>
    %cst_17 = arith.constant 0.000000e+00 : f32
    %22 = vector.broadcast %cst_17 : f32 to vector<8x128xf32>
    %23 = arith.maximumf %21, %22 : vector<8x128xf32>
    %24 = arith.truncf %23 : vector<8x128xf32> to vector<8x128xbf16>
    %c0_18 = arith.constant 0 : index
    %c0_19 = arith.constant 0 : index
    %25 = vector.load %arg8[%c0_18, %c0_19] : memref<128x4xbf16, #tpu.memory_space<vmem>>, vector<128x4xbf16>
    %cst_20 = arith.constant dense<0.000000e+00> : vector<8x4xf32>
    %26 = tpu.matmul %24, %25, %cst_20 {dimension_numbers = #tpu.dot_dimension_numbers<[1], [0], [0], [1], [0, 0, 1, 1], [], []>} : vector<8x128xbf16>, vector<128x4xbf16>, vector<8x4xf32> -> vector<8x4xf32>
    %c0_21 = arith.constant 0 : index
    %c0_22 = arith.constant 0 : index
    %27 = vector.load %arg9[%c0_21, %c0_22] : memref<1x4xf32, #tpu.memory_space<vmem>>, vector<1x4xf32>
    %28 = vector.broadcast %27 : vector<1x4xf32> to vector<8x4xf32>
    %29 = arith.addf %26, %28 : vector<8x4xf32>
    %cst_23 = arith.constant dense<0xFF800000> : vector<8xf32>
    %30 = vector.multi_reduction <maximumf>, %29, %cst_23 [1] : vector<8x4xf32> to vector<8xf32>
    %31 = vector.shape_cast %30 : vector<8xf32> to vector<8x1xf32>
    %32 = vector.broadcast %31 : vector<8x1xf32> to vector<8x4xf32>
    %33 = arith.subf %29, %32 : vector<8x4xf32>
    %34 = math.exp %33 : vector<8x4xf32>
    %cst_24 = arith.constant dense<0.000000e+00> : vector<8xf32>
    %35 = vector.multi_reduction <add>, %34, %cst_24 [1] : vector<8x4xf32> to vector<8xf32>
    %36 = vector.shape_cast %35 : vector<8xf32> to vector<8x1xf32>
    %37 = math.log %36 : vector<8x1xf32>
    %38 = vector.broadcast %37 : vector<8x1xf32> to vector<8x4xf32>
    %39 = arith.subf %33, %38 : vector<8x4xf32>
    %c0_25 = arith.constant 0 : index
    %c0_26 = arith.constant 0 : index
    %40 = vector.load %arg10[%c0_25, %c0_26] : memref<8x4xf32, #tpu.memory_space<vmem>>, vector<8x4xf32>
    tpu.vector_store %arg10[%c0_25, %c0_26], %39 {strides = array<i32>} : memref<8x4xf32, #tpu.memory_space<vmem>>, vector<8x4xf32>,
    return
  }
  func.func @transform_0(%arg0: i32) -> (i32, i32) {
    %c0_i32 = arith.constant 0 : i32
    %c0_i32_0 = arith.constant 0 : i32
    return %arg0, %c0_i32 : i32, i32
  }
  func.func @transform_1(%arg0: i32) -> (i32, i32) {
    %c0_i32 = arith.constant 0 : i32
    %c0_i32_0 = arith.constant 0 : i32
    %c0_i32_1 = arith.constant 0 : i32
    return %c0_i32, %c0_i32_0 : i32, i32
  }
  func.func @transform_2(%arg0: i32) -> (i32, i32) {
    %c0_i32 = arith.constant 0 : i32
    %c0_i32_0 = arith.constant 0 : i32
    %c0_i32_1 = arith.constant 0 : i32
    return %c0_i32, %c0_i32_0 : i32, i32
  }
  func.func @transform_3(%arg0: i32) -> (i32, i32) {
    %c0_i32 = arith.constant 0 : i32
    %c0_i32_0 = arith.constant 0 : i32
    %c0_i32_1 = arith.constant 0 : i32
    return %c0_i32, %c0_i32_0 : i32, i32
  }
  func.func @transform_4(%arg0: i32) -> (i32, i32) {
    %c0_i32 = arith.constant 0 : i32
    %c0_i32_0 = arith.constant 0 : i32
    %c0_i32_1 = arith.constant 0 : i32
    return %c0_i32, %c0_i32_0 : i32, i32
  }
  func.func @transform_5(%arg0: i32) -> (i32, i32) {
    %c0_i32 = arith.constant 0 : i32
    %c0_i32_0 = arith.constant 0 : i32
    %c0_i32_1 = arith.constant 0 : i32
    return %c0_i32, %c0_i32_0 : i32, i32
  }
  func.func @transform_6(%arg0: i32) -> (i32, i32) {
    %c0_i32 = arith.constant 0 : i32
    %c0_i32_0 = arith.constant 0 : i32
    %c0_i32_1 = arith.constant 0 : i32
    return %c0_i32, %c0_i32_0 : i32, i32
  }
  func.func @transform_7(%arg0: i32) -> (i32, i32) {
    %c0_i32 = arith.constant 0 : i32
    %c0_i32_0 = arith.constant 0 : i32
    %c0_i32_1 = arith.constant 0 : i32
    return %c0_i32, %c0_i32_0 : i32, i32
  }
  func.func @transform_8(%arg0: i32) -> (i32, i32) {
    %c0_i32 = arith.constant 0 : i32
    %c0_i32_0 = arith.constant 0 : i32
    %c0_i32_1 = arith.constant 0 : i32
    return %c0_i32, %c0_i32_0 : i32, i32
  }
  func.func @transform_9(%arg0: i32) -> (i32, i32) {
    %c0_i32 = arith.constant 0 : i32
    %c0_i32_0 = arith.constant 0 : i32
    return %arg0, %c0_i32 : i32, i32
  }
}

module attributes {stable_mosaic.version = 11 : i64} {
  func.func @dqn_kernel(%arg0: i32, %arg1: memref<8x16xbf16, #tpu.memory_space<vmem>>, %arg2: memref<16x128xbf16, #tpu.memory_space<vmem>>, %arg3: memref<1x128xf32, #tpu.memory_space<vmem>>, %arg4: memref<128x128xbf16, #tpu.memory_space<vmem>>, %arg5: memref<1x128xf32, #tpu.memory_space<vmem>>, %arg6: memref<128x128xbf16, #tpu.memory_space<vmem>>, %arg7: memref<1x128xf32, #tpu.memory_space<vmem>>, %arg8: memref<128x4xbf16, #tpu.memory_space<vmem>>, %arg9: memref<1x4xf32, #tpu.memory_space<vmem>>, %arg10: memref<8x4xf32, #tpu.memory_space<vmem>>) attributes {dimension_semantics = [#tpu.dimension_semantics<parallel>], iteration_bounds = array<i64: 1>, scalar_prefetch = 0 : i64, scratch_operands = 0 : i64, tpu.core_type = #tpu.core_type<tc>, window_params = [{transform_indices = @transform_0, window_bounds = array<i64: 8, 16>}, {pipeline_mode = #tpu.pipeline_mode<synchronous>, transform_indices = @transform_1, window_bounds = array<i64: 16, 128>}, {pipeline_mode = #tpu.pipeline_mode<synchronous>, transform_indices = @transform_2, window_bounds = array<i64: 1, 128>}, {pipeline_mode = #tpu.pipeline_mode<synchronous>, transform_indices = @transform_3, window_bounds = array<i64: 128, 128>}, {pipeline_mode = #tpu.pipeline_mode<synchronous>, transform_indices = @transform_4, window_bounds = array<i64: 1, 128>}, {pipeline_mode = #tpu.pipeline_mode<synchronous>, transform_indices = @transform_5, window_bounds = array<i64: 128, 128>}, {pipeline_mode = #tpu.pipeline_mode<synchronous>, transform_indices = @transform_6, window_bounds = array<i64: 1, 128>}, {pipeline_mode = #tpu.pipeline_mode<synchronous>, transform_indices = @transform_7, window_bounds = array<i64: 128, 4>}, {pipeline_mode = #tpu.pipeline_mode<synchronous>, transform_indices = @transform_8, window_bounds = array<i64: 1, 4>}, {transform_indices = @transform_9, window_bounds = array<i64: 8, 4>}]} {
    %c0 = arith.constant 0 : index
    %c0_0 = arith.constant 0 : index
    %0 = vector.load %arg1[%c0, %c0_0] : memref<8x16xbf16, #tpu.memory_space<vmem>>, vector<8x16xbf16>
    %c0_1 = arith.constant 0 : index
    %c0_2 = arith.constant 0 : index
    %1 = vector.load %arg2[%c0_1, %c0_2] : memref<16x128xbf16, #tpu.memory_space<vmem>>, vector<16x128xbf16>
    %cst = arith.constant dense<0.000000e+00> : vector<8x128xf32>
    %2 = tpu.matmul %0, %1, %cst {dimension_numbers = #tpu.dot_dimension_numbers<[1], [0], [0], [1], [0, 0, 1, 1], [], []>} : vector<8x16xbf16>, vector<16x128xbf16>, vector<8x128xf32> -> vector<8x128xf32>
    %c0_3 = arith.constant 0 : index
    %c0_4 = arith.constant 0 : index
    %3 = vector.load %arg3[%c0_3, %c0_4] : memref<1x128xf32, #tpu.memory_space<vmem>>, vector<1x128xf32>
    %4 = vector.broadcast %3 : vector<1x128xf32> to vector<8x128xf32>
    %5 = arith.addf %2, %4 : vector<8x128xf32>
    %cst_5 = arith.constant 0.000000e+00 : f32
    %6 = vector.broadcast %cst_5 : f32 to vector<8x128xf32>
    %7 = arith.maximumf %5, %6 : vector<8x128xf32>
    %8 = arith.truncf %7 : vector<8x128xf32> to vector<8x128xbf16>
    %c0_6 = arith.constant 0 : index
    %c0_7 = arith.constant 0 : index
    %9 = vector.load %arg4[%c0_6, %c0_7] : memref<128x128xbf16, #tpu.memory_space<vmem>>, vector<128x128xbf16>
    %cst_8 = arith.constant dense<0.000000e+00> : vector<8x128xf32>
    %10 = tpu.matmul %8, %9, %cst_8 {dimension_numbers = #tpu.dot_dimension_numbers<[1], [0], [0], [1], [0, 0, 1, 1], [], []>} : vector<8x128xbf16>, vector<128x128xbf16>, vector<8x128xf32> -> vector<8x128xf32>
    %c0_9 = arith.constant 0 : index
    %c0_10 = arith.constant 0 : index
    %11 = vector.load %arg5[%c0_9, %c0_10] : memref<1x128xf32, #tpu.memory_space<vmem>>, vector<1x128xf32>
    %12 = vector.broadcast %11 : vector<1x128xf32> to vector<8x128xf32>
    %13 = arith.addf %10, %12 : vector<8x128xf32>
    %cst_11 = arith.constant 0.000000e+00 : f32
    %14 = vector.broadcast %cst_11 : f32 to vector<8x128xf32>
    %15 = arith.maximumf %13, %14 : vector<8x128xf32>
    %16 = arith.truncf %15 : vector<8x128xf32> to vector<8x128xbf16>
    %c0_12 = arith.constant 0 : index
    %c0_13 = arith.constant 0 : index
    %17 = vector.load %arg6[%c0_12, %c0_13] : memref<128x128xbf16, #tpu.memory_space<vmem>>, vector<128x128xbf16>
    %cst_14 = arith.constant dense<0.000000e+00> : vector<8x128xf32>
    %18 = tpu.matmul %16, %17, %cst_14 {dimension_numbers = #tpu.dot_dimension_numbers<[1], [0], [0], [1], [0, 0, 1, 1], [], []>} : vector<8x128xbf16>, vector<128x128xbf16>, vector<8x128xf32> -> vector<8x128xf32>
    %c0_15 = arith.constant 0 : index
    %c0_16 = arith.constant 0 : index
    %19 = vector.load %arg7[%c0_15, %c0_16] : memref<1x128xf32, #tpu.memory_space<vmem>>, vector<1x128xf32>
    %20 = vector.broadcast %19 : vector<1x128xf32> to vector<8x128xf32>
    %21 = arith.addf %18, %20 : vector<8x128xf32>
    %cst_17 = arith.constant 0.000000e+00 : f32
    %22 = vector.broadcast %cst_17 : f32 to vector<8x128xf32>
    %23 = arith.maximumf %21, %22 : vector<8x128xf32>
    %24 = arith.truncf %23 : vector<8x128xf32> to vector<8x128xbf16>
    %c0_18 = arith.constant 0 : index
    %c0_19 = arith.constant 0 : index
    %25 = vector.load %arg8[%c0_18, %c0_19] : memref<128x4xbf16, #tpu.memory_space<vmem>>, vector<128x4xbf16>
    %cst_20 = arith.constant dense<0.000000e+00> : vector<8x4xf32>
    %26 = tpu.matmul %24, %25, %cst_20 {dimension_numbers = #tpu.dot_dimension_numbers<[1], [0], [0], [1], [0, 0, 1, 1], [], []>} : vector<8x128xbf16>, vector<128x4xbf16>, vector<8x4xf32> -> vector<8x4xf32>
    %c0_21 = arith.constant 0 : index
    %c0_22 = arith.constant 0 : index
    %27 = vector.load %arg9[%c0_21, %c0_22] : memref<1x4xf32, #tpu.memory_space<vmem>>, vector<1x4xf32>
    %28 = vector.broadcast %27 : vector<1x4xf32> to vector<8x4xf32>
    %29 = arith.addf %26, %28 : vector<8x4xf32>
    %cst_23 = arith.constant dense<0xFF800000> : vector<8xf32>
    %30 = vector.multi_reduction <maximumf>, %29, %cst_23 [1] : vector<8x4xf32> to vector<8xf32>
    %31 = vector.shape_cast %30 : vector<8xf32> to vector<8x1xf32>
    %32 = vector.broadcast %31 : vector<8x1xf32> to vector<8x4xf32>
    %33 = arith.subf %29, %32 : vector<8x4xf32>
    %34 = math.exp %33 : vector<8x4xf32>
    %cst_24 = arith.constant dense<0.000000e+00> : vector<8xf32>
    %35 = vector.multi_reduction <add>, %34, %cst_24 [1] : vector<8x4xf32> to vector<8xf32>
    %36 = vector.shape_cast %35 : vector<8xf32> to vector<8x1xf32>
    %37 = math.log %36 : vector<8x1xf32>
    %38 = vector.broadcast %37 : vector<8x1xf32> to vector<8x4xf32>
    %39 = arith.subf %33, %38 : vector<8x4xf32>
    %c0_25 = arith.constant 0 : index
    %c0_26 = arith.constant 0 : index
    %40 = vector.load %arg10[%c0_25, %c0_26] : memref<8x4xf32, #tpu.memory_space<vmem>>, vector<8x4xf32>
    tpu.vector_store %arg10[%c0_25, %c0_26], %39 {strides = array<i32>} : memref<8x4xf32, #tpu.memory_space<vmem>>, vector<8x4xf32>,
    return
  }
  func.func @transform_0(%arg0: i32) -> (i32, i32) {
    %c0_i32 = arith.constant 0 : i32
    %c0_i32_0 = arith.constant 0 : i32
    return %arg0, %c0_i32 : i32, i32
  }
  func.func @transform_1(%arg0: i32) -> (i32, i32) {
    %c0_i32 = arith.constant 0 : i32
    %c0_i32_0 = arith.constant 0 : i32
    %c0_i32_1 = arith.constant 0 : i32
    return %c0_i32, %c0_i32_0 : i32, i32
  }
  func.func @transform_2(%arg0: i32) -> (i32, i32) {
    %c0_i32 = arith.constant 0 : i32
    %c0_i32_0 = arith.constant 0 : i32
    %c0_i32_1 = arith.constant 0 : i32
    return %c0_i32, %c0_i32_0 : i32, i32
  }
  func.func @transform_3(%arg0: i32) -> (i32, i32) {
    %c0_i32 = arith.constant 0 : i32
    %c0_i32_0 = arith.constant 0 : i32
    %c0_i32_1 = arith.constant 0 : i32
    return %c0_i32, %c0_i32_0 : i32, i32
  }
  func.func @transform_4(%arg0: i32) -> (i32, i32) {
    %c0_i32 = arith.constant 0 : i32
    %c0_i32_0 = arith.constant 0 : i32
    %c0_i32_1 = arith.constant 0 : i32
    return %c0_i32, %c0_i32_0 : i32, i32
  }
  func.func @transform_5(%arg0: i32) -> (i32, i32) {
    %c0_i32 = arith.constant 0 : i32
    %c0_i32_0 = arith.constant 0 : i32
    %c0_i32_1 = arith.constant 0 : i32
    return %c0_i32, %c0_i32_0 : i32, i32
  }
  func.func @transform_6(%arg0: i32) -> (i32, i32) {
    %c0_i32 = arith.constant 0 : i32
    %c0_i32_0 = arith.constant 0 : i32
    %c0_i32_1 = arith.constant 0 : i32
    return %c0_i32, %c0_i32_0 : i32, i32
  }
  func.func @transform_7(%arg0: i32) -> (i32, i32) {
    %c0_i32 = arith.constant 0 : i32
    %c0_i32_0 = arith.constant 0 : i32
    %c0_i32_1 = arith.constant 0 : i32
    return %c0_i32, %c0_i32_0 : i32, i32
  }
  func.func @transform_8(%arg0: i32) -> (i32, i32) {
    %c0_i32 = arith.constant 0 : i32
    %c0_i32_0 = arith.constant 0 : i32
    %c0_i32_1 = arith.constant 0 : i32
    return %c0_i32, %c0_i32_0 : i32, i32
  }
  func.func @transform_9(%arg0: i32) -> (i32, i32) {
    %c0_i32 = arith.constant 0 : i32
    %c0_i32_0 = arith.constant 0 : i32
    return %arg0, %c0_i32 : i32, i32
  }
}

</mosaic_0001>

<llo_original>
// kernel: tpu_custom_call.1
$region0: #{tpu_custom_call.1}
  #allocation0 [shape = 'u32[]', space=smem, size = 0x4, offset = 0x4, fixed_abs, tag = 'smem constant byte address 0x4 - core index']
  #allocation1 [shape = 'u32[72,128]{1,0:T(1,128)}', space=vmem, size = 0x9000, scoped, tag = 'internal scratch']
  %s0 = inlined_call_operand.vmem [shape: bf16[8,16], index: 0, kind: input, shape index: {}]
  %s1 = inlined_call_operand.hbm [shape: bf16[16,128], index: 1, kind: input, shape index: {}]
  %s2 = inlined_call_operand.hbm [shape: f32[1,128], index: 2, kind: input, shape index: {}]
  %s3 = inlined_call_operand.vmem [shape: bf16[128,128], index: 3, kind: input, shape index: {}]
  %s4 = inlined_call_operand.hbm [shape: f32[1,128], index: 4, kind: input, shape index: {}]
  %s5 = inlined_call_operand.hbm [shape: bf16[128,128], index: 5, kind: input, shape index: {}]
  %s6 = inlined_call_operand.vmem [shape: f32[1,128], index: 6, kind: input, shape index: {}]
  %s7 = inlined_call_operand.vmem [shape: bf16[128,4], index: 7, kind: input, shape index: {}]
  %s8 = inlined_call_operand.vmem [shape: f32[1,4], index: 8, kind: input, shape index: {}]
  %s9 = inlined_call_operand.vmem [shape: f32[8,4], index: 9, kind: output, shape index: {}]
  %s10 = sld [smem:[#allocation0]]
  $region62: #{tpu_custom_call.1} parent=0
    _
  %s12 = ssub.s32 1, %s10
  %s13 = scalar_select 0, %s12, %s10
  $region1: #{tpu_custom_call.1} parent=0
    #allocation2 [shape = 'u8[4096]{0}', space=vmem, size = 0x1000, scoped, tag = 'input window, operand 1, single buffered']
    #allocation3 [shape = 's32[1]{0}', space=sflag, size = 0x4, scoped, tag = 'scoped memory for tpu_custom_call.1']
    #allocation4 [shape = 'u8[512]{0}', space=vmem, size = 0x400, scoped, tag = 'input window, operand 2, single buffered']
    #allocation5 [shape = 's32[1]{0}', space=sflag, size = 0x4, scoped, tag = 'scoped memory for tpu_custom_call.1']
    #allocation6 [shape = 'u8[512]{0}', space=vmem, size = 0x400, scoped, tag = 'input window, operand 4, single buffered']
    #allocation7 [shape = 'u8[32768]{0}', space=vmem, size = 0x8000, scoped, tag = 'input window, operand 5, single buffered']
    #allocation8 [shape = 's32[1]{0}', space=sflag, size = 0x4, scoped, tag = 'scoped memory for tpu_custom_call.1']
    %14 = vsyncpa [#allocation3], 0
    %15 = vsyncpa [#allocation5], 0
    %16 = vsyncpa [#allocation8], 0
    // Predicated region
    $region2: #{tpu_custom_call.1} parent=1 // pred_check
      _
    $region3: #{tpu_custom_call.1} parent=1 // pred_check_branch
      %18 = sbr.rel (0) target = $region5
    $region4: #{tpu_custom_call.1} parent=1 // pred_region
      _
    $region5: #{tpu_custom_call.1} parent=1 // pred_fallthru
      _
    // Predicated region
    $region6: #{tpu_custom_call.1} parent=1 // pred_check
      _
    $region7: #{tpu_custom_call.1} parent=1 // pred_check_branch
      %20 = sbr.rel (0) target = $region9
    $region8: #{tpu_custom_call.1} parent=1 // pred_region
      %22 = vsyncadd [#allocation3], 0
      %s23 = sshll.u32 %s1, 4
      %s24 = int_to_ptr.hbm [resolvable:$true] %s23
      %s25 = sshll.u32 [#allocation2], 4
      %s26 = int_to_ptr.vmem [resolvable:$true] %s25
      %31 = dma.hbm_to_vmem [thread:$0]  %s24, 128, %s26, [#allocation3], 64, 64, 4
    $region9: #{tpu_custom_call.1} parent=1 // pred_fallthru
      _
    // Predicated region
    $region10: #{tpu_custom_call.1} parent=1 // pred_check
      _
    $region11: #{tpu_custom_call.1} parent=1 // pred_check_branch
      %33 = sbr.rel (0) target = $region13
    $region12: #{tpu_custom_call.1} parent=1 // pred_region
      %35 = vsyncadd [#allocation5], 0
      %s37 = sshll.u32 %s2, 4
      %s38 = int_to_ptr.hbm [resolvable:$true] %s37
      %s39 = sshll.u32 [#allocation4], 4
      %s40 = int_to_ptr.vmem [resolvable:$true] %s39
      %42 = dma.hbm_to_vmem [thread:$0]  %s38, 16, %s40, [#allocation5]
    $region13: #{tpu_custom_call.1} parent=1 // pred_fallthru
      _
    // Predicated region
    $region14: #{tpu_custom_call.1} parent=1 // pred_check
      _
    $region15: #{tpu_custom_call.1} parent=1 // pred_check_branch
      %44 = sbr.rel (0) target = $region17
    $region16: #{tpu_custom_call.1} parent=1 // pred_region
      _
    $region17: #{tpu_custom_call.1} parent=1 // pred_fallthru
      _
    // Predicated region
    $region18: #{tpu_custom_call.1} parent=1 // pred_check
      _
    $region19: #{tpu_custom_call.1} parent=1 // pred_check_branch
      %46 = sbr.rel (0) target = $region21
    $region20: #{tpu_custom_call.1} parent=1 // pred_region
      %48 = vsyncadd [#allocation5], 0
      %s50 = sshll.u32 %s4, 4
      %s51 = int_to_ptr.hbm [resolvable:$true] %s50
      %s52 = sshll.u32 [#allocation6], 4
      %s53 = int_to_ptr.vmem [resolvable:$true] %s52
      %55 = dma.hbm_to_vmem [thread:$0]  %s51, 16, %s53, [#allocation5]
    $region21: #{tpu_custom_call.1} parent=1 // pred_fallthru
      _
    // Predicated region
    $region22: #{tpu_custom_call.1} parent=1 // pred_check
      _
    $region23: #{tpu_custom_call.1} parent=1 // pred_check_branch
      %57 = sbr.rel (0) target = $region25
    $region24: #{tpu_custom_call.1} parent=1 // pred_region
      %59 = vsyncadd [#allocation8], 0
      %s60 = sshll.u32 %s5, 4
      %s61 = int_to_ptr.hbm [resolvable:$true] %s60
      %s62 = sshll.u32 [#allocation7], 4
      %s63 = int_to_ptr.vmem [resolvable:$true] %s62
      %68 = dma.hbm_to_vmem [thread:$0]  %s61, 1024, %s63, [#allocation8], 64, 64, 4
    $region25: #{tpu_custom_call.1} parent=1 // pred_fallthru
      _
    // Predicated region
    $region26: #{tpu_custom_call.1} parent=1 // pred_check
      _
    $region27: #{tpu_custom_call.1} parent=1 // pred_check_branch
      %70 = sbr.rel (0) target = $region29
    $region28: #{tpu_custom_call.1} parent=1 // pred_region
      _
    $region29: #{tpu_custom_call.1} parent=1 // pred_fallthru
      _
    // Predicated region
    $region30: #{tpu_custom_call.1} parent=1 // pred_check
      _
    $region31: #{tpu_custom_call.1} parent=1 // pred_check_branch
      %72 = sbr.rel (0) target = $region33
    $region32: #{tpu_custom_call.1} parent=1 // pred_region
      _
    $region33: #{tpu_custom_call.1} parent=1 // pred_fallthru
      _
    // Predicated region
    $region34: #{tpu_custom_call.1} parent=1 // pred_check
      _
    $region35: #{tpu_custom_call.1} parent=1 // pred_check_branch
      %74 = sbr.rel (0) target = $region37
    $region36: #{tpu_custom_call.1} parent=1 // pred_region
      _
    $region37: #{tpu_custom_call.1} parent=1 // pred_fallthru
      _
    // Predicated region
    $region38: #{tpu_custom_call.1} parent=1 // pred_check
      _
    $region39: #{tpu_custom_call.1} parent=1 // pred_check_branch
      %76 = sbr.rel (0) target = $region41
    $region40: #{tpu_custom_call.1} parent=1 // pred_region
      %78 = dma.done [#allocation3], 128
    $region41: #{tpu_custom_call.1} parent=1 // pred_fallthru
      _
    // Predicated region
    $region42: #{tpu_custom_call.1} parent=1 // pred_check
      _
    $region43: #{tpu_custom_call.1} parent=1 // pred_check_branch
      %80 = sbr.rel (0) target = $region45
    $region44: #{tpu_custom_call.1} parent=1 // pred_region
      %82 = dma.done [#allocation5], 16
    $region45: #{tpu_custom_call.1} parent=1 // pred_fallthru
      _
    // Predicated region
    $region46: #{tpu_custom_call.1} parent=1 // pred_check
      _
    $region47: #{tpu_custom_call.1} parent=1 // pred_check_branch
      %84 = sbr.rel (0) target = $region49
    $region48: #{tpu_custom_call.1} parent=1 // pred_region
      %86 = dma.done [#allocation5], 16
    $region49: #{tpu_custom_call.1} parent=1 // pred_fallthru
      _
    // Predicated region
    $region50: #{tpu_custom_call.1} parent=1 // pred_check
      _
    $region51: #{tpu_custom_call.1} parent=1 // pred_check_branch
      %88 = sbr.rel (0) target = $region53
    $region52: #{tpu_custom_call.1} parent=1 // pred_region
      %90 = dma.done [#allocation8], 1024
    $region53: #{tpu_custom_call.1} parent=1 // pred_fallthru
      _
    %v92 = vld [vmem:[%s0] sm:$0xf]
    %v93 = vld [vmem:[#allocation2] sm:$0xf]
    %v94 = vld [vmem:[#allocation2 + $0x4] sm:$0xf]
    %v95 = vld [vmem:[#allocation4] sm:$0x1]
    %v97 = vperm.slane %v95, 0
    %v101 = vunpack.c.l.b16 %v93
    %v102 = vunpack.c.l.b16 %v94
    %v103 = vpack.c.b16 %v102, %v101
    %vm105 = vcmask 130048
    %v107 = vsel %vm105, %v92, 0
    %109 = vmatpush.bf16.msra.mxu0 0
    %110 = vmatpush.bf16.msra.mxu0 0
    %111 = vmatpush.bf16.msra.mxu0 0
    %112 = vmatpush.bf16.msra.mxu0 0
    %113 = vmatpush.bf16.msra.mxu0 0
    %114 = vmatpush.bf16.msra.mxu0 0
    %115 = vmatpush.bf16.msra.mxu0 0
    %116 = vmatpush.bf16.msra.mxu0 %v103
    %117 = vmatmul.bf16.gmra.mxu0 %v107
    %v118 = vpop.f32.mrf.mxu0
    %v119 = vadd.f32 %v97, %v118
    %v120 = vpop.f32.mrf.mxu0
    %121 = vdwg.mxu0
    %v122 = vmax.f32 %v119, 0.0
    %v123 = vpack.c.bf16 %v122, %v122
    %v124 = vld [vmem:[%s3] sm:$0xf]
    %v125 = vld [vmem:[%s3 + $0x4] sm:$0xf]
    %v126 = vld [vmem:[%s3 + $0x8] sm:$0xf]
    %v127 = vld [vmem:[%s3 + $0xc] sm:$0xf]
    %v128 = vld [vmem:[%s3 + $0x10] sm:$0xf]
    %v129 = vld [vmem:[%s3 + $0x14] sm:$0xf]
    %v130 = vld [vmem:[%s3 + $0x18] sm:$0xf]
    %v131 = vld [vmem:[%s3 + $0x1c] sm:$0xf]
    %v132 = vld [vmem:[%s3 + $0x20] sm:$0xf]
    %v133 = vld [vmem:[%s3 + $0x24] sm:$0xf]
    %v134 = vld [vmem:[%s3 + $0x28] sm:$0xf]
    %v135 = vld [vmem:[%s3 + $0x2c] sm:$0xf]
    %v136 = vld [vmem:[%s3 + $0x30] sm:$0xf]
    %v137 = vld [vmem:[%s3 + $0x34] sm:$0xf]
    %v138 = vld [vmem:[%s3 + $0x38] sm:$0xf]
    %v139 = vld [vmem:[%s3 + $0x3c] sm:$0xf]
    %v140 = vld [vmem:[#allocation6] sm:$0x1]
    %v142 = vperm.slane %v140, 0
    %v160 = vunpack.c.l.b16 %v124
    %v161 = vunpack.c.l.b16 %v125
    %v162 = vunpack.c.l.b16 %v126
    %v163 = vunpack.c.l.b16 %v127
    %v164 = vunpack.c.l.b16 %v128
    %v165 = vunpack.c.l.b16 %v129
    %v166 = vunpack.c.l.b16 %v130
    %v167 = vunpack.c.l.b16 %v131
    %v168 = vunpack.c.l.b16 %v132
    %v169 = vunpack.c.l.b16 %v133
    %v170 = vunpack.c.l.b16 %v134
    %v171 = vunpack.c.l.b16 %v135
    %v172 = vunpack.c.l.b16 %v136
    %v173 = vunpack.c.l.b16 %v137
    %v174 = vunpack.c.l.b16 %v138
    %v175 = vunpack.c.l.b16 %v139
    %v176 = vpack.c.b16 %v161, %v160
    %v177 = vpack.c.b16 %v163, %v162
    %v178 = vpack.c.b16 %v165, %v164
    %v179 = vpack.c.b16 %v167, %v166
    %v180 = vpack.c.b16 %v169, %v168
    %v181 = vpack.c.b16 %v171, %v170
    %v182 = vpack.c.b16 %v173, %v172
    %v183 = vpack.c.b16 %v175, %v174
    %192 = vmatpush.bf16.msra.mxu0 %v183
    %193 = vmatpush.bf16.msra.mxu0 %v182
    %194 = vmatpush.bf16.msra.mxu0 %v181
    %195 = vmatpush.bf16.msra.mxu0 %v180
    %196 = vmatpush.bf16.msra.mxu0 %v179
    %197 = vmatpush.bf16.msra.mxu0 %v178
    %198 = vmatpush.bf16.msra.mxu0 %v177
    %199 = vmatpush.bf16.msra.mxu0 %v176
    %200 = vmatmul.bf16.gmra.mxu0 %v123
    %v201 = vpop.f32.mrf.mxu0
    %v202 = vadd.f32 %v142, %v201
    %v203 = vpop.f32.mrf.mxu0
    %204 = vdwg.mxu0
    %v205 = vmax.f32 %v202, 0.0
    %v206 = vpack.c.bf16 %v205, %v205
    %v207 = vld [vmem:[#allocation7] sm:$0xf]
    %v208 = vld [vmem:[#allocation7 + $0x4] sm:$0xf]
    %v209 = vld [vmem:[#allocation7 + $0x8] sm:$0xf]
    %v210 = vld [vmem:[#allocation7 + $0xc] sm:$0xf]
    %v211 = vld [vmem:[#allocation7 + $0x10] sm:$0xf]
    %v212 = vld [vmem:[#allocation7 + $0x14] sm:$0xf]
    %v213 = vld [vmem:[#allocation7 + $0x18] sm:$0xf]
    %v214 = vld [vmem:[#allocation7 + $0x1c] sm:$0xf]
    %v215 = vld [vmem:[#allocation7 + $0x20] sm:$0xf]
    %v216 = vld [vmem:[#allocation7 + $0x24] sm:$0xf]
    %v217 = vld [vmem:[#allocation7 + $0x28] sm:$0xf]
    %v218 = vld [vmem:[#allocation7 + $0x2c] sm:$0xf]
    %v219 = vld [vmem:[#allocation7 + $0x30] sm:$0xf]
    %v220 = vld [vmem:[#allocation7 + $0x34] sm:$0xf]
    %v221 = vld [vmem:[#allocation7 + $0x38] sm:$0xf]
    %v222 = vld [vmem:[#allocation7 + $0x3c] sm:$0xf]
    %v223 = vld [vmem:[%s6] sm:$0x1]
    %v225 = vperm.slane %v223, 0
    %v243 = vunpack.c.l.b16 %v207
    %v244 = vunpack.c.l.b16 %v208
    %v245 = vunpack.c.l.b16 %v209
    %v246 = vunpack.c.l.b16 %v210
    %v247 = vunpack.c.l.b16 %v211
    %v248 = vunpack.c.l.b16 %v212
    %v249 = vunpack.c.l.b16 %v213
    %v250 = vunpack.c.l.b16 %v214
    %v251 = vunpack.c.l.b16 %v215
    %v252 = vunpack.c.l.b16 %v216
    %v253 = vunpack.c.l.b16 %v217
    %v254 = vunpack.c.l.b16 %v218
    %v255 = vunpack.c.l.b16 %v219
    %v256 = vunpack.c.l.b16 %v220
    %v257 = vunpack.c.l.b16 %v221
    %v258 = vunpack.c.l.b16 %v222
    %v259 = vpack.c.b16 %v244, %v243
    %v260 = vpack.c.b16 %v246, %v245
    %v261 = vpack.c.b16 %v248, %v247
    %v262 = vpack.c.b16 %v250, %v249
    %v263 = vpack.c.b16 %v252, %v251
    %v264 = vpack.c.b16 %v254, %v253
    %v265 = vpack.c.b16 %v256, %v255
    %v266 = vpack.c.b16 %v258, %v257
    %275 = vmatpush.bf16.msra.mxu0 %v266
    %276 = vmatpush.bf16.msra.mxu0 %v265
    %277 = vmatpush.bf16.msra.mxu0 %v264
    %278 = vmatpush.bf16.msra.mxu0 %v263
    %279 = vmatpush.bf16.msra.mxu0 %v262
    %280 = vmatpush.bf16.msra.mxu0 %v261
    %281 = vmatpush.bf16.msra.mxu0 %v260
    %282 = vmatpush.bf16.msra.mxu0 %v259
    %283 = vmatmul.bf16.gmra.mxu0 %v206
    %v284 = vpop.f32.mrf.mxu0
    %v285 = vadd.f32 %v225, %v284
    %v286 = vpop.f32.mrf.mxu0
    %287 = vdwg.mxu0
    %v288 = vmax.f32 %v285, 0.0
    %v289 = vpack.c.bf16 %v288, %v288
    %v290 = vld [vmem:[%s7] sm:$0xf]
    %v291 = vld [vmem:[%s7 + $0x4] sm:$0xf]
    %v292 = vld [vmem:[%s7 + $0x8] sm:$0xf]
    %v293 = vld [vmem:[%s7 + $0xc] sm:$0xf]
    %v294 = vld [vmem:[%s7 + $0x10] sm:$0xf]
    %v295 = vld [vmem:[%s7 + $0x14] sm:$0xf]
    %v296 = vld [vmem:[%s7 + $0x18] sm:$0xf]
    %v297 = vld [vmem:[%s7 + $0x1c] sm:$0xf]
    %v298 = vld [vmem:[%s7 + $0x20] sm:$0xf]
    %v299 = vld [vmem:[%s7 + $0x24] sm:$0xf]
    %v300 = vld [vmem:[%s7 + $0x28] sm:$0xf]
    %v301 = vld [vmem:[%s7 + $0x2c] sm:$0xf]
    %v302 = vld [vmem:[%s7 + $0x30] sm:$0xf]
    %v303 = vld [vmem:[%s7 + $0x34] sm:$0xf]
    %v304 = vld [vmem:[%s7 + $0x38] sm:$0xf]
    %v305 = vld [vmem:[%s7 + $0x3c] sm:$0xf]
    %v306 = vld [vmem:[%s8] sm:$0x1]
    %v308 = vperm.slane %v306, 0
    %v326 = vunpack.c.l.b16 %v290
    %v327 = vunpack.c.l.b16 %v291
    %v328 = vunpack.c.l.b16 %v292
    %v329 = vunpack.c.l.b16 %v293
    %v330 = vunpack.c.l.b16 %v294
    %v331 = vunpack.c.l.b16 %v295
    %v332 = vunpack.c.l.b16 %v296
    %v333 = vunpack.c.l.b16 %v297
    %v334 = vunpack.c.l.b16 %v298
    %v335 = vunpack.c.l.b16 %v299
    %v336 = vunpack.c.l.b16 %v300
    %v337 = vunpack.c.l.b16 %v301
    %v338 = vunpack.c.l.b16 %v302
    %v339 = vunpack.c.l.b16 %v303
    %v340 = vunpack.c.l.b16 %v304
    %v341 = vunpack.c.l.b16 %v305
    %v342 = vpack.c.b16 %v327, %v326
    %v343 = vpack.c.b16 %v329, %v328
    %v344 = vpack.c.b16 %v331, %v330
    %v345 = vpack.c.b16 %v333, %v332
    %v346 = vpack.c.b16 %v335, %v334
    %v347 = vpack.c.b16 %v337, %v336
    %v348 = vpack.c.b16 %v339, %v338
    %v349 = vpack.c.b16 %v341, %v340
    %358 = vmatpush.bf16.msra.mxu0 %v349
    %359 = vmatpush.bf16.msra.mxu0 %v348
    %360 = vmatpush.bf16.msra.mxu0 %v347
    %361 = vmatpush.bf16.msra.mxu0 %v346
    %362 = vmatpush.bf16.msra.mxu0 %v345
    %363 = vmatpush.bf16.msra.mxu0 %v344
    %364 = vmatpush.bf16.msra.mxu0 %v343
    %365 = vmatpush.bf16.msra.mxu0 %v342
    %366 = vmatmul.bf16.gmra.mxu0 %v289
    %v367 = vpop.f32.mrf.mxu0
    %v368 = vadd.f32 %v308, %v367
    %v369 = vpop.f32.mrf.mxu0
    %370 = vdwg.mxu0
    %vm371 = vcmask 31744
    %v372 = vsel %vm371, %v368, -inf
    %373 = vmax.xlane.f32.xlu0 %v372
    %v374 = vpop.xlane.xlu0 %373
    %v375 = vsub.f32 %v368, %v374
    %v376 = vmul.f32 %v375, 1.442695
    %v377 = vpow.pop %v376
    %v378 = vsel %vm371, %v377, 0.0
    %379 = vadd.xlane.f32.xlu0 %v378
    %v380 = vpop.xlane.xlu0 %379
    %v381 = vlog2.pop %v380
    %v382 = vmul.f32 %v381, 0.6931472
    %v383 = vsub.f32 %v375, %v382
    %384 = vst.msk [vmem:[%s9] sm:$0xff] %vm371, %v383
    // Predicated region
    $region54: #{tpu_custom_call.1} parent=1 // pred_check
      _
    $region55: #{tpu_custom_call.1} parent=1 // pred_check_branch
      %386 = sbr.rel (0) target = $region57
    $region56: #{tpu_custom_call.1} parent=1 // pred_region
      _
    $region57: #{tpu_custom_call.1} parent=1 // pred_fallthru
      _
    // Predicated region
    $region58: #{tpu_custom_call.1} parent=1 // pred_check
      _
    $region59: #{tpu_custom_call.1} parent=1 // pred_check_branch
      %388 = sbr.rel (0) target = $region61
    $region60: #{tpu_custom_call.1} parent=1 // pred_region
      _
    $region61: #{tpu_custom_call.1} parent=1 // pred_fallthru
      _
    %389 = vsyncpa [#allocation3], 1
    %390 = vsyncpa [#allocation5], 1
    %391 = vsyncpa [#allocation8], 1

// kernel: tpu_custom_call.1
$region0: #{tpu_custom_call.1}
  #allocation0 [shape = 'u32[]', space=smem, size = 0x4, offset = 0x4, fixed_abs, tag = 'smem constant byte address 0x4 - core index']
  #allocation1 [shape = 'u32[72,128]{1,0:T(1,128)}', space=vmem, size = 0x9000, scoped, tag = 'internal scratch']
  %s0 = inlined_call_operand.vmem [shape: bf16[8,16], index: 0, kind: input, shape index: {}]
  %s1 = inlined_call_operand.hbm [shape: bf16[16,128], index: 1, kind: input, shape index: {}]
  %s2 = inlined_call_operand.hbm [shape: f32[1,128], index: 2, kind: input, shape index: {}]
  %s3 = inlined_call_operand.vmem [shape: bf16[128,128], index: 3, kind: input, shape index: {}]
  %s4 = inlined_call_operand.hbm [shape: f32[1,128], index: 4, kind: input, shape index: {}]
  %s5 = inlined_call_operand.hbm [shape: bf16[128,128], index: 5, kind: input, shape index: {}]
  %s6 = inlined_call_operand.vmem [shape: f32[1,128], index: 6, kind: input, shape index: {}]
  %s7 = inlined_call_operand.vmem [shape: bf16[128,4], index: 7, kind: input, shape index: {}]
  %s8 = inlined_call_operand.vmem [shape: f32[1,4], index: 8, kind: input, shape index: {}]
  %s9 = inlined_call_operand.vmem [shape: f32[8,4], index: 9, kind: output, shape index: {}]
  %s10 = sld [smem:[#allocation0]]
  $region62: #{tpu_custom_call.1} parent=0
    _
  %s12 = ssub.s32 1, %s10
  %s13 = scalar_select 0, %s12, %s10
  $region1: #{tpu_custom_call.1} parent=0
    #allocation2 [shape = 'u8[4096]{0}', space=vmem, size = 0x1000, scoped, tag = 'input window, operand 1, single buffered']
    #allocation3 [shape = 's32[1]{0}', space=sflag, size = 0x4, scoped, tag = 'scoped memory for tpu_custom_call.1']
    #allocation4 [shape = 'u8[512]{0}', space=vmem, size = 0x400, scoped, tag = 'input window, operand 2, single buffered']
    #allocation5 [shape = 's32[1]{0}', space=sflag, size = 0x4, scoped, tag = 'scoped memory for tpu_custom_call.1']
    #allocation6 [shape = 'u8[512]{0}', space=vmem, size = 0x400, scoped, tag = 'input window, operand 4, single buffered']
    #allocation7 [shape = 'u8[32768]{0}', space=vmem, size = 0x8000, scoped, tag = 'input window, operand 5, single buffered']
    #allocation8 [shape = 's32[1]{0}', space=sflag, size = 0x4, scoped, tag = 'scoped memory for tpu_custom_call.1']
    %14 = vsyncpa [#allocation3], 0
    %15 = vsyncpa [#allocation5], 0
    %16 = vsyncpa [#allocation8], 0
    // Predicated region
    $region2: #{tpu_custom_call.1} parent=1 // pred_check
      _
    $region3: #{tpu_custom_call.1} parent=1 // pred_check_branch
      %18 = sbr.rel (0) target = $region5
    $region4: #{tpu_custom_call.1} parent=1 // pred_region
      _
    $region5: #{tpu_custom_call.1} parent=1 // pred_fallthru
      _
    // Predicated region
    $region6: #{tpu_custom_call.1} parent=1 // pred_check
      _
    $region7: #{tpu_custom_call.1} parent=1 // pred_check_branch
      %20 = sbr.rel (0) target = $region9
    $region8: #{tpu_custom_call.1} parent=1 // pred_region
      %22 = vsyncadd [#allocation3], 0
      %s23 = sshll.u32 %s1, 4
      %s24 = int_to_ptr.hbm [resolvable:$true] %s23
      %s25 = sshll.u32 [#allocation2], 4
      %s26 = int_to_ptr.vmem [resolvable:$true] %s25
      %31 = dma.hbm_to_vmem [thread:$0]  %s24, 128, %s26, [#allocation3], 64, 64, 4
    $region9: #{tpu_custom_call.1} parent=1 // pred_fallthru
      _
    // Predicated region
    $region10: #{tpu_custom_call.1} parent=1 // pred_check
      _
    $region11: #{tpu_custom_call.1} parent=1 // pred_check_branch
      %33 = sbr.rel (0) target = $region13
    $region12: #{tpu_custom_call.1} parent=1 // pred_region
      %35 = vsyncadd [#allocation5], 0
      %s37 = sshll.u32 %s2, 4
      %s38 = int_to_ptr.hbm [resolvable:$true] %s37
      %s39 = sshll.u32 [#allocation4], 4
      %s40 = int_to_ptr.vmem [resolvable:$true] %s39
      %42 = dma.hbm_to_vmem [thread:$0]  %s38, 16, %s40, [#allocation5]
    $region13: #{tpu_custom_call.1} parent=1 // pred_fallthru
      _
    // Predicated region
    $region14: #{tpu_custom_call.1} parent=1 // pred_check
      _
    $region15: #{tpu_custom_call.1} parent=1 // pred_check_branch
      %44 = sbr.rel (0) target = $region17
    $region16: #{tpu_custom_call.1} parent=1 // pred_region
      _
    $region17: #{tpu_custom_call.1} parent=1 // pred_fallthru
      _
    // Predicated region
    $region18: #{tpu_custom_call.1} parent=1 // pred_check
      _
    $region19: #{tpu_custom_call.1} parent=1 // pred_check_branch
      %46 = sbr.rel (0) target = $region21
    $region20: #{tpu_custom_call.1} parent=1 // pred_region
      %48 = vsyncadd [#allocation5], 0
      %s50 = sshll.u32 %s4, 4
      %s51 = int_to_ptr.hbm [resolvable:$true] %s50
      %s52 = sshll.u32 [#allocation6], 4
      %s53 = int_to_ptr.vmem [resolvable:$true] %s52
      %55 = dma.hbm_to_vmem [thread:$0]  %s51, 16, %s53, [#allocation5]
    $region21: #{tpu_custom_call.1} parent=1 // pred_fallthru
      _
    // Predicated region
    $region22: #{tpu_custom_call.1} parent=1 // pred_check
      _
    $region23: #{tpu_custom_call.1} parent=1 // pred_check_branch
      %57 = sbr.rel (0) target = $region25
    $region24: #{tpu_custom_call.1} parent=1 // pred_region
      %59 = vsyncadd [#allocation8], 0
      %s60 = sshll.u32 %s5, 4
      %s61 = int_to_ptr.hbm [resolvable:$true] %s60
      %s62 = sshll.u32 [#allocation7], 4
      %s63 = int_to_ptr.vmem [resolvable:$true] %s62
      %68 = dma.hbm_to_vmem [thread:$0]  %s61, 1024, %s63, [#allocation8], 64, 64, 4
    $region25: #{tpu_custom_call.1} parent=1 // pred_fallthru
      _
    // Predicated region
    $region26: #{tpu_custom_call.1} parent=1 // pred_check
      _
    $region27: #{tpu_custom_call.1} parent=1 // pred_check_branch
      %70 = sbr.rel (0) target = $region29
    $region28: #{tpu_custom_call.1} parent=1 // pred_region
      _
    $region29: #{tpu_custom_call.1} parent=1 // pred_fallthru
      _
    // Predicated region
    $region30: #{tpu_custom_call.1} parent=1 // pred_check
      _
    $region31: #{tpu_custom_call.1} parent=1 // pred_check_branch
      %72 = sbr.rel (0) target = $region33
    $region32: #{tpu_custom_call.1} parent=1 // pred_region
      _
    $region33: #{tpu_custom_call.1} parent=1 // pred_fallthru
      _
    // Predicated region
    $region34: #{tpu_custom_call.1} parent=1 // pred_check
      _
    $region35: #{tpu_custom_call.1} parent=1 // pred_check_branch
      %74 = sbr.rel (0) target = $region37
    $region36: #{tpu_custom_call.1} parent=1 // pred_region
      _
    $region37: #{tpu_custom_call.1} parent=1 // pred_fallthru
      _
    // Predicated region
    $region38: #{tpu_custom_call.1} parent=1 // pred_check
      _
    $region39: #{tpu_custom_call.1} parent=1 // pred_check_branch
      %76 = sbr.rel (0) target = $region41
    $region40: #{tpu_custom_call.1} parent=1 // pred_region
      %78 = dma.done [#allocation3], 128
    $region41: #{tpu_custom_call.1} parent=1 // pred_fallthru
      _
    // Predicated region
    $region42: #{tpu_custom_call.1} parent=1 // pred_check
      _
    $region43: #{tpu_custom_call.1} parent=1 // pred_check_branch
      %80 = sbr.rel (0) target = $region45
    $region44: #{tpu_custom_call.1} parent=1 // pred_region
      %82 = dma.done [#allocation5], 16
    $region45: #{tpu_custom_call.1} parent=1 // pred_fallthru
      _
    // Predicated region
    $region46: #{tpu_custom_call.1} parent=1 // pred_check
      _
    $region47: #{tpu_custom_call.1} parent=1 // pred_check_branch
      %84 = sbr.rel (0) target = $region49
    $region48: #{tpu_custom_call.1} parent=1 // pred_region
      %86 = dma.done [#allocation5], 16
    $region49: #{tpu_custom_call.1} parent=1 // pred_fallthru
      _
    // Predicated region
    $region50: #{tpu_custom_call.1} parent=1 // pred_check
      _
    $region51: #{tpu_custom_call.1} parent=1 // pred_check_branch
      %88 = sbr.rel (0) target = $region53
    $region52: #{tpu_custom_call.1} parent=1 // pred_region
      %90 = dma.done [#allocation8], 1024
    $region53: #{tpu_custom_call.1} parent=1 // pred_fallthru
      _
    %v92 = vld [vmem:[%s0] sm:$0xf]
    %v93 = vld [vmem:[#allocation2] sm:$0xf]
    %v94 = vld [vmem:[#allocation2 + $0x4] sm:$0xf]
    %v95 = vld [vmem:[#allocation4] sm:$0x1]
    %v97 = vperm.slane %v95, 0
    %v101 = vunpack.c.l.b16 %v93
    %v102 = vunpack.c.l.b16 %v94
    %v103 = vpack.c.b16 %v102, %v101
    %vm105 = vcmask 130048
    %v107 = vsel %vm105, %v92, 0
    %109 = vmatpush.bf16.msra.mxu0 0
    %110 = vmatpush.bf16.msra.mxu0 0
    %111 = vmatpush.bf16.msra.mxu0 0
    %112 = vmatpush.bf16.msra.mxu0 0
    %113 = vmatpush.bf16.msra.mxu0 0
    %114 = vmatpush.bf16.msra.mxu0 0
    %115 = vmatpush.bf16.msra.mxu0 0
    %116 = vmatpush.bf16.msra.mxu0 %v103
    %117 = vmatmul.bf16.gmra.mxu0 %v107
    %v118 = vpop.f32.mrf.mxu0
    %v119 = vadd.f32 %v97, %v118
    %v120 = vpop.f32.mrf.mxu0
    %121 = vdwg.mxu0
    %v122 = vmax.f32 %v119, 0.0
    %v123 = vpack.c.bf16 %v122, %v122
    %v124 = vld [vmem:[%s3] sm:$0xf]
    %v125 = vld [vmem:[%s3 + $0x4] sm:$0xf]
    %v126 = vld [vmem:[%s3 + $0x8] sm:$0xf]
    %v127 = vld [vmem:[%s3 + $0xc] sm:$0xf]
    %v128 = vld [vmem:[%s3 + $0x10] sm:$0xf]
    %v129 = vld [vmem:[%s3 + $0x14] sm:$0xf]
    %v130 = vld [vmem:[%s3 + $0x18] sm:$0xf]
    %v131 = vld [vmem:[%s3 + $0x1c] sm:$0xf]
    %v132 = vld [vmem:[%s3 + $0x20] sm:$0xf]
    %v133 = vld [vmem:[%s3 + $0x24] sm:$0xf]
    %v134 = vld [vmem:[%s3 + $0x28] sm:$0xf]
    %v135 = vld [vmem:[%s3 + $0x2c] sm:$0xf]
    %v136 = vld [vmem:[%s3 + $0x30] sm:$0xf]
    %v137 = vld [vmem:[%s3 + $0x34] sm:$0xf]
    %v138 = vld [vmem:[%s3 + $0x38] sm:$0xf]
    %v139 = vld [vmem:[%s3 + $0x3c] sm:$0xf]
    %v140 = vld [vmem:[#allocation6] sm:$0x1]
    %v142 = vperm.slane %v140, 0
    %v160 = vunpack.c.l.b16 %v124
    %v161 = vunpack.c.l.b16 %v125
    %v162 = vunpack.c.l.b16 %v126
    %v163 = vunpack.c.l.b16 %v127
    %v164 = vunpack.c.l.b16 %v128
    %v165 = vunpack.c.l.b16 %v129
    %v166 = vunpack.c.l.b16 %v130
    %v167 = vunpack.c.l.b16 %v131
    %v168 = vunpack.c.l.b16 %v132
    %v169 = vunpack.c.l.b16 %v133
    %v170 = vunpack.c.l.b16 %v134
    %v171 = vunpack.c.l.b16 %v135
    %v172 = vunpack.c.l.b16 %v136
    %v173 = vunpack.c.l.b16 %v137
    %v174 = vunpack.c.l.b16 %v138
    %v175 = vunpack.c.l.b16 %v139
    %v176 = vpack.c.b16 %v161, %v160
    %v177 = vpack.c.b16 %v163, %v162
    %v178 = vpack.c.b16 %v165, %v164
    %v179 = vpack.c.b16 %v167, %v166
    %v180 = vpack.c.b16 %v169, %v168
    %v181 = vpack.c.b16 %v171, %v170
    %v182 = vpack.c.b16 %v173, %v172
    %v183 = vpack.c.b16 %v175, %v174
    %192 = vmatpush.bf16.msra.mxu0 %v183
    %193 = vmatpush.bf16.msra.mxu0 %v182
    %194 = vmatpush.bf16.msra.mxu0 %v181
    %195 = vmatpush.bf16.msra.mxu0 %v180
    %196 = vmatpush.bf16.msra.mxu0 %v179
    %197 = vmatpush.bf16.msra.mxu0 %v178
    %198 = vmatpush.bf16.msra.mxu0 %v177
    %199 = vmatpush.bf16.msra.mxu0 %v176
    %200 = vmatmul.bf16.gmra.mxu0 %v123
    %v201 = vpop.f32.mrf.mxu0
    %v202 = vadd.f32 %v142, %v201
    %v203 = vpop.f32.mrf.mxu0
    %204 = vdwg.mxu0
    %v205 = vmax.f32 %v202, 0.0
    %v206 = vpack.c.bf16 %v205, %v205
    %v207 = vld [vmem:[#allocation7] sm:$0xf]
    %v208 = vld [vmem:[#allocation7 + $0x4] sm:$0xf]
    %v209 = vld [vmem:[#allocation7 + $0x8] sm:$0xf]
    %v210 = vld [vmem:[#allocation7 + $0xc] sm:$0xf]
    %v211 = vld [vmem:[#allocation7 + $0x10] sm:$0xf]
    %v212 = vld [vmem:[#allocation7 + $0x14] sm:$0xf]
    %v213 = vld [vmem:[#allocation7 + $0x18] sm:$0xf]
    %v214 = vld [vmem:[#allocation7 + $0x1c] sm:$0xf]
    %v215 = vld [vmem:[#allocation7 + $0x20] sm:$0xf]
    %v216 = vld [vmem:[#allocation7 + $0x24] sm:$0xf]
    %v217 = vld [vmem:[#allocation7 + $0x28] sm:$0xf]
    %v218 = vld [vmem:[#allocation7 + $0x2c] sm:$0xf]
    %v219 = vld [vmem:[#allocation7 + $0x30] sm:$0xf]
    %v220 = vld [vmem:[#allocation7 + $0x34] sm:$0xf]
    %v221 = vld [vmem:[#allocation7 + $0x38] sm:$0xf]
    %v222 = vld [vmem:[#allocation7 + $0x3c] sm:$0xf]
    %v223 = vld [vmem:[%s6] sm:$0x1]
    %v225 = vperm.slane %v223, 0
    %v243 = vunpack.c.l.b16 %v207
    %v244 = vunpack.c.l.b16 %v208
    %v245 = vunpack.c.l.b16 %v209
    %v246 = vunpack.c.l.b16 %v210
    %v247 = vunpack.c.l.b16 %v211
    %v248 = vunpack.c.l.b16 %v212
    %v249 = vunpack.c.l.b16 %v213
    %v250 = vunpack.c.l.b16 %v214
    %v251 = vunpack.c.l.b16 %v215
    %v252 = vunpack.c.l.b16 %v216
    %v253 = vunpack.c.l.b16 %v217
    %v254 = vunpack.c.l.b16 %v218
    %v255 = vunpack.c.l.b16 %v219
    %v256 = vunpack.c.l.b16 %v220
    %v257 = vunpack.c.l.b16 %v221
    %v258 = vunpack.c.l.b16 %v222
    %v259 = vpack.c.b16 %v244, %v243
    %v260 = vpack.c.b16 %v246, %v245
    %v261 = vpack.c.b16 %v248, %v247
    %v262 = vpack.c.b16 %v250, %v249
    %v263 = vpack.c.b16 %v252, %v251
    %v264 = vpack.c.b16 %v254, %v253
    %v265 = vpack.c.b16 %v256, %v255
    %v266 = vpack.c.b16 %v258, %v257
    %275 = vmatpush.bf16.msra.mxu0 %v266
    %276 = vmatpush.bf16.msra.mxu0 %v265
    %277 = vmatpush.bf16.msra.mxu0 %v264
    %278 = vmatpush.bf16.msra.mxu0 %v263
    %279 = vmatpush.bf16.msra.mxu0 %v262
    %280 = vmatpush.bf16.msra.mxu0 %v261
    %281 = vmatpush.bf16.msra.mxu0 %v260
    %282 = vmatpush.bf16.msra.mxu0 %v259
    %283 = vmatmul.bf16.gmra.mxu0 %v206
    %v284 = vpop.f32.mrf.mxu0
    %v285 = vadd.f32 %v225, %v284
    %v286 = vpop.f32.mrf.mxu0
    %287 = vdwg.mxu0
    %v288 = vmax.f32 %v285, 0.0
    %v289 = vpack.c.bf16 %v288, %v288
    %v290 = vld [vmem:[%s7] sm:$0xf]
    %v291 = vld [vmem:[%s7 + $0x4] sm:$0xf]
    %v292 = vld [vmem:[%s7 + $0x8] sm:$0xf]
    %v293 = vld [vmem:[%s7 + $0xc] sm:$0xf]
    %v294 = vld [vmem:[%s7 + $0x10] sm:$0xf]
    %v295 = vld [vmem:[%s7 + $0x14] sm:$0xf]
    %v296 = vld [vmem:[%s7 + $0x18] sm:$0xf]
    %v297 = vld [vmem:[%s7 + $0x1c] sm:$0xf]
    %v298 = vld [vmem:[%s7 + $0x20] sm:$0xf]
    %v299 = vld [vmem:[%s7 + $0x24] sm:$0xf]
    %v300 = vld [vmem:[%s7 + $0x28] sm:$0xf]
    %v301 = vld [vmem:[%s7 + $0x2c] sm:$0xf]
    %v302 = vld [vmem:[%s7 + $0x30] sm:$0xf]
    %v303 = vld [vmem:[%s7 + $0x34] sm:$0xf]
    %v304 = vld [vmem:[%s7 + $0x38] sm:$0xf]
    %v305 = vld [vmem:[%s7 + $0x3c] sm:$0xf]
    %v306 = vld [vmem:[%s8] sm:$0x1]
    %v308 = vperm.slane %v306, 0
    %v326 = vunpack.c.l.b16 %v290
    %v327 = vunpack.c.l.b16 %v291
    %v328 = vunpack.c.l.b16 %v292
    %v329 = vunpack.c.l.b16 %v293
    %v330 = vunpack.c.l.b16 %v294
    %v331 = vunpack.c.l.b16 %v295
    %v332 = vunpack.c.l.b16 %v296
    %v333 = vunpack.c.l.b16 %v297
    %v334 = vunpack.c.l.b16 %v298
    %v335 = vunpack.c.l.b16 %v299
    %v336 = vunpack.c.l.b16 %v300
    %v337 = vunpack.c.l.b16 %v301
    %v338 = vunpack.c.l.b16 %v302
    %v339 = vunpack.c.l.b16 %v303
    %v340 = vunpack.c.l.b16 %v304
    %v341 = vunpack.c.l.b16 %v305
    %v342 = vpack.c.b16 %v327, %v326
    %v343 = vpack.c.b16 %v329, %v328
    %v344 = vpack.c.b16 %v331, %v330
    %v345 = vpack.c.b16 %v333, %v332
    %v346 = vpack.c.b16 %v335, %v334
    %v347 = vpack.c.b16 %v337, %v336
    %v348 = vpack.c.b16 %v339, %v338
    %v349 = vpack.c.b16 %v341, %v340
    %358 = vmatpush.bf16.msra.mxu0 %v349
    %359 = vmatpush.bf16.msra.mxu0 %v348
    %360 = vmatpush.bf16.msra.mxu0 %v347
    %361 = vmatpush.bf16.msra.mxu0 %v346
    %362 = vmatpush.bf16.msra.mxu0 %v345
    %363 = vmatpush.bf16.msra.mxu0 %v344
    %364 = vmatpush.bf16.msra.mxu0 %v343
    %365 = vmatpush.bf16.msra.mxu0 %v342
    %366 = vmatmul.bf16.gmra.mxu0 %v289
    %v367 = vpop.f32.mrf.mxu0
    %v368 = vadd.f32 %v308, %v367
    %v369 = vpop.f32.mrf.mxu0
    %370 = vdwg.mxu0
    %vm371 = vcmask 31744
    %v372 = vsel %vm371, %v368, -inf
    %373 = vmax.xlane.f32.xlu0 %v372
    %v374 = vpop.xlane.xlu0 %373
    %v375 = vsub.f32 %v368, %v374
    %v376 = vmul.f32 %v375, 1.442695
    %v377 = vpow.pop %v376
    %v378 = vsel %vm371, %v377, 0.0
    %379 = vadd.xlane.f32.xlu0 %v378
    %v380 = vpop.xlane.xlu0 %379
    %v381 = vlog2.pop %v380
    %v382 = vmul.f32 %v381, 0.6931472
    %v383 = vsub.f32 %v375, %v382
    %384 = vst.msk [vmem:[%s9] sm:$0xff] %vm371, %v383
    // Predicated region
    $region54: #{tpu_custom_call.1} parent=1 // pred_check
      _
    $region55: #{tpu_custom_call.1} parent=1 // pred_check_branch
      %386 = sbr.rel (0) target = $region57
    $region56: #{tpu_custom_call.1} parent=1 // pred_region
      _
    $region57: #{tpu_custom_call.1} parent=1 // pred_fallthru
      _
    // Predicated region
    $region58: #{tpu_custom_call.1} parent=1 // pred_check
      _
    $region59: #{tpu_custom_call.1} parent=1 // pred_check_branch
      %388 = sbr.rel (0) target = $region61
    $region60: #{tpu_custom_call.1} parent=1 // pred_region
      _
    $region61: #{tpu_custom_call.1} parent=1 // pred_fallthru
      _
    %389 = vsyncpa [#allocation3], 1
    %390 = vsyncpa [#allocation5], 1
    %391 = vsyncpa [#allocation8], 1

</llo_original>
